<compile_context>
chip_gen: v7x
topology: tpu7x:2x2x1
jax: 0.10.0
libtpu: 0.0.40
codegen_flags: <defaults>
</compile_context>

<pallas_src>
import jax
import jax.numpy as jnp
from jax.experimental import pallas as pl
from jax.experimental.pallas import tpu as pltpu

_LANE = 128
_SUBLANE = 8
_CHUNK = _LANE * _SUBLANE          # 1024 elements
_N_SPLIT = 2                       # leading "parallel" grid axis (v7x dual-TC)


def _device_plan():
    """Row-tile budget + VMEM limit per TPU generation.

    Per-input block = tr * 128 * 4 B (f32); 4 inputs x 2 pipeline buffers:
      tr=4096 -> 16 MiB of pipeline buffers, tr=2048 -> 8 MiB.
    """
    kind = ""
    try:
        kind = jax.devices()[0].device_kind.lower()
    except Exception:
        pass
    if "v7" in kind:
        # v7x: 64 MiB physical / 32 MiB scoped default VMEM -> leave headroom.
        return 4096, 40 * 1024 * 1024
    if "v6" in kind:
        # v6e: 128 MiB physical VMEM.
        return 4096, 48 * 1024 * 1024
    # v5e / older / unknown: smaller tiles, still raise the 16 MiB default.
    return 2048, 32 * 1024 * 1024


_TR_MAX, _VMEM_LIMIT = _device_plan()


def _prep(x):
    """Split x into a lane-aligned (rows, 128) slab (zero-copy reshape when the
    size is a multiple of 1024) plus a small flat tail (< 1024 elements)."""
    flat = jnp.ravel(x)
    n = flat.shape[0]
    n_main = (n // _CHUNK) * _CHUNK
    if n_main == 0:
        # Whole tensor handled by the padded tail block; dummy zero slab keeps
        # the fused kernel signature uniform and contributes exactly 0.
        return jnp.zeros((_SUBLANE, _LANE), jnp.float32), flat
    if n_main == n:
        return flat.reshape(n // _LANE, _LANE), flat[:0]
    return flat[:n_main].reshape(n_main // _LANE, _LANE), flat[n_main:]


def _tail_block(tail):
    """Zero-pad a (<1024-element) tail into one (8, 128) f32 block.

    Both members of a pair are padded with the same zeros, so padded positions
    contribute exactly 0 to the squared-error sum."""
    k = tail.shape[0]
    if k == 0:
        return jnp.zeros((_SUBLANE, _LANE), jnp.float32)
    buf = jnp.zeros((_CHUNK,), jnp.float32).at[:k].set(tail.astype(jnp.float32))
    return buf.reshape(_SUBLANE, _LANE)


def _make_kernel(plan1, plan2, half, total):
    """Kernel computing per-core (8,128) partial SSE blocks for two pairs."""
    rows1, tr1, nb1 = plan1
    rows2, tr2, nb2 = plan2

    def _pair_update(gb, a_ref, b_ref, out_ref, rows, tr, nb_i):
        def _block_sse(valid_rows=None):
            d = a_ref[...].astype(jnp.float32) - b_ref[...].astype(jnp.float32)
            if valid_rows is not None:
                # Mask BEFORE squaring so garbage in the overhanging rows of
                # the ragged last block can never leak into the sum.
                rid = jax.lax.broadcasted_iota(jnp.int32, (tr, _LANE), 0)
                d = jnp.where(rid < valid_rows, d, 0.0)
            sq = d * d
            # Reduce only across whole (8,128) vregs (pure VALU adds); the
            # sublane/lane reduces happen once, in the XLA epilogue.
            out_ref[...] += sq.reshape(tr // _SUBLANE, _SUBLANE, _LANE).sum(axis=0)

        ragged = rows % tr
        if ragged == 0:
            if nb_i == total:
                _block_sse()                      # every grid point is a full block
            else:
                @pl.when(gb < nb_i)               # skip clamped (revisited) blocks
                def _():
                    _block_sse()
        else:
            # Unmasked fast path for full blocks ...
            @pl.when(gb < nb_i - 1)
            def _():
                _block_sse()

            # ... masked path only for the single ragged last block.
            @pl.when(gb == nb_i - 1)
            def _():
                _block_sse(valid_rows=ragged)

    def kernel(a1_ref, b1_ref, a2_ref, b2_ref,
               ta1_ref, tb1_ref, ta2_ref, tb2_ref,
               out1_ref, out2_ref):
        c = pl.program_id(0)                      # core-split index ("parallel")
        g = pl.program_id(1)                      # block index within this split
        gb = c * half + g                         # global block index

        @pl.when(g == 0)                          # fresh per-core accumulators
        def _():
            out1_ref[...] = jnp.zeros_like(out1_ref)
            out2_ref[...] = jnp.zeros_like(out2_ref)

        @pl.when(jnp.logical_and(c == 0, g == 0))
        def _():
            # <1024-element tails, zero-padded to one (8,128) block per tensor.
            d1 = ta1_ref[...] - tb1_ref[...]
            d2 = ta2_ref[...] - tb2_ref[...]
            out1_ref[...] += d1 * d1
            out2_ref[...] += d2 * d2

        _pair_update(gb, a1_ref, b1_ref, out1_ref, rows1, tr1, nb1)
        _pair_update(gb, a2_ref, b2_ref, out2_ref, rows2, tr2, nb2)

    return kernel


def _fused_sse(a1, b1, a2, b2, ta1, tb1, ta2, tb2):
    """Returns two (n_split, 8, 128) f32 partial-SSE blocks (one per pair)."""
    rows1, rows2 = a1.shape[0], a2.shape[0]
    tr1 = min(_TR_MAX, rows1)
    tr2 = min(_TR_MAX, rows2)
    nb1 = -(-rows1 // tr1)
    nb2 = -(-rows2 // tr2)
    nb_max = max(nb1, nb2)

    n_split = _N_SPLIT if nb_max >= _N_SPLIT else 1
    half = -(-nb_max // n_split)                  # blocks per core
    total = n_split * half                        # grid points (>= nb_max)

    kernel = _make_kernel((rows1, tr1, nb1), (rows2, tr2, nb2), half, total)

    def _main_map(nb_i):
        if nb_i == total:
            return lambda c, g: (c * half + g, 0)
        last = nb_i - 1
        # Clamp past-the-end positions to the last valid block: the block index
        # stops changing (no extra DMA within a core) and pl.when skips compute.
        return lambda c, g: (jnp.minimum(c * half + g, last), 0)

    tail_spec = pl.BlockSpec((_SUBLANE, _LANE), lambda c, g: (0, 0))
    out_spec = pl.BlockSpec((None, _SUBLANE, _LANE), lambda c, g: (c, 0, 0))
    out_sds = jax.ShapeDtypeStruct((n_split, _SUBLANE, _LANE), jnp.float32)

    return pl.pallas_call(
        kernel,
        out_shape=(out_sds, out_sds),
        grid_spec=pltpu.PrefetchScalarGridSpec(
            num_scalar_prefetch=0,
            grid=(n_split, half),
            in_specs=[
                pl.BlockSpec((tr1, _LANE), _main_map(nb1)),
                pl.BlockSpec((tr1, _LANE), _main_map(nb1)),
                pl.BlockSpec((tr2, _LANE), _main_map(nb2)),
                pl.BlockSpec((tr2, _LANE), _main_map(nb2)),
                tail_spec, tail_spec, tail_spec, tail_spec,
            ],
            out_specs=(out_spec, out_spec),
        ),
        compiler_params=pltpu.CompilerParams(
            dimension_semantics=("parallel", "arbitrary"),
            vmem_limit_bytes=_VMEM_LIMIT,
        ),
    )(a1, b1, a2, b2, ta1, tb1, ta2, tb2)


@jax.jit
def custom_loss_ez_hx_hy(prediction, truth, lz, rz):
    """Forward pass of CustomLossEzHxHy: (MSE(lz, rz), MSE(prediction, truth))."""
    a1, ta1 = _prep(lz)
    b1, tb1 = _prep(rz)
    a2, ta2 = _prep(prediction)
    b2, tb2 = _prep(truth)

    out1, out2 = _fused_sse(
        a1, b1, a2, b2,
        _tail_block(ta1), _tail_block(tb1),
        _tail_block(ta2), _tail_block(tb2),
    )

    loss_ph = jnp.sum(out1) / jnp.float32(lz.size)
    loss_data = jnp.sum(out2) / jnp.float32(prediction.size)
    return loss_ph, loss_data


if __name__ == "__main__":
    key = jax.random.PRNGKey(0)
    k1, k2, k3, k4 = jax.random.split(key, 4)

    # Small NCHW-like shapes: Ez/Hx/Hy field predictions and PDE residuals.
    prediction = jax.random.normal(k1, (2, 4, 16, 16), dtype=jnp.float32)
    truth = jax.random.normal(k2, (2, 4, 16, 16), dtype=jnp.float32)
    lz = jax.random.normal(k3, (2, 3, 16, 16), dtype=jnp.float32)
    rz = jax.random.normal(k4, (2, 3, 16, 16), dtype=jnp.float32)

    loss_ph, loss_data = custom_loss_ez_hx_hy(prediction, truth, lz, rz)
    jax.block_until_ready((loss_ph, loss_data))

    # Cross-check against plain-JAX MSE (same semantics as nn.MSELoss()).
    ref_ph = jnp.mean((lz - rz) ** 2)
    ref_data = jnp.mean((prediction - truth) ** 2)
    assert jnp.allclose(loss_ph, ref_ph, rtol=1e-5, atol=1e-6)
    assert jnp.allclose(loss_data, ref_data, rtol=1e-5, atol=1e-6)

    print("KERNEL_OK")
</pallas_src>

<mosaic_0001>
module attributes {stable_mosaic.version = 11 : i64} {
  func.func @kernel(%arg0: i32, %arg1: i32, %arg2: memref<8x128xf32, #tpu.memory_space<vmem>>, %arg3: memref<8x128xf32, #tpu.memory_space<vmem>>, %arg4: memref<16x128xf32, #tpu.memory_space<vmem>>, %arg5: memref<16x128xf32, #tpu.memory_space<vmem>>, %arg6: memref<8x128xf32, #tpu.memory_space<vmem>>, %arg7: memref<8x128xf32, #tpu.memory_space<vmem>>, %arg8: memref<8x128xf32, #tpu.memory_space<vmem>>, %arg9: memref<8x128xf32, #tpu.memory_space<vmem>>, %arg10: memref<1x8x128xf32, #tpu.memory_space<vmem>>, %arg11: memref<1x8x128xf32, #tpu.memory_space<vmem>>) attributes {dimension_semantics = [#tpu.dimension_semantics<parallel>, #tpu.dimension_semantics<arbitrary>], iteration_bounds = array<i64: 1, 1>, scalar_prefetch = 0 : i64, scratch_operands = 0 : i64, tpu.core_type = #tpu.core_type<tc>, window_params = [{transform_indices = @transform_0, window_bounds = array<i64: 8, 128>}, {transform_indices = @transform_1, window_bounds = array<i64: 8, 128>}, {transform_indices = @transform_2, window_bounds = array<i64: 16, 128>}, {transform_indices = @transform_3, window_bounds = array<i64: 16, 128>}, {pipeline_mode = #tpu.pipeline_mode<synchronous>, transform_indices = @transform_4, window_bounds = array<i64: 8, 128>}, {pipeline_mode = #tpu.pipeline_mode<synchronous>, transform_indices = @transform_5, window_bounds = array<i64: 8, 128>}, {pipeline_mode = #tpu.pipeline_mode<synchronous>, transform_indices = @transform_6, window_bounds = array<i64: 8, 128>}, {pipeline_mode = #tpu.pipeline_mode<synchronous>, transform_indices = @transform_7, window_bounds = array<i64: 8, 128>}, {transform_indices = @transform_8, window_bounds = array<i64: 1, 8, 128>}, {transform_indices = @transform_9, window_bounds = array<i64: 1, 8, 128>}]} {
    %c0_i32 = arith.constant 0 : i32
    %0 = arith.cmpi eq, %arg1, %c0_i32 : i32
    %1 = arith.extui %0 : i1 to i32
    %c0_i32_0 = arith.constant 0 : i32
    %2 = arith.cmpi ne, %1, %c0_i32_0 : i32
    scf.if %2 {
      %cst_24 = arith.constant 0.000000e+00 : f32
      %32 = vector.broadcast %cst_24 : f32 to vector<8x128xf32>
      %c0_25 = arith.constant 0 : index
      %c0_26 = arith.constant 0 : index
      %c0_27 = arith.constant 0 : index
      %33 = vector.load %arg10[%c0_25, %c0_26, %c0_27] : memref<1x8x128xf32, #tpu.memory_space<vmem>>, vector<1x8x128xf32>
      %34 = vector.shape_cast %33 : vector<1x8x128xf32> to vector<8x128xf32>
      %35 = vector.shape_cast %32 : vector<8x128xf32> to vector<1x8x128xf32>
      tpu.vector_store %arg10[%c0_25, %c0_26, %c0_27], %35 {strides = array<i32>} : memref<1x8x128xf32, #tpu.memory_space<vmem>>, vector<1x8x128xf32>,
      %cst_28 = arith.constant 0.000000e+00 : f32
      %36 = vector.broadcast %cst_28 : f32 to vector<8x128xf32>
      %c0_29 = arith.constant 0 : index
      %c0_30 = arith.constant 0 : index
      %c0_31 = arith.constant 0 : index
      %37 = vector.load %arg11[%c0_29, %c0_30, %c0_31] : memref<1x8x128xf32, #tpu.memory_space<vmem>>, vector<1x8x128xf32>
      %38 = vector.shape_cast %37 : vector<1x8x128xf32> to vector<8x128xf32>
      %39 = vector.shape_cast %36 : vector<8x128xf32> to vector<1x8x128xf32>
      tpu.vector_store %arg11[%c0_29, %c0_30, %c0_31], %39 {strides = array<i32>} : memref<1x8x128xf32, #tpu.memory_space<vmem>>, vector<1x8x128xf32>,
    } else {
    }
    %c0_i32_1 = arith.constant 0 : i32
    %3 = arith.cmpi eq, %arg0, %c0_i32_1 : i32
    %c0_i32_2 = arith.constant 0 : i32
    %4 = arith.cmpi eq, %arg1, %c0_i32_2 : i32
    %5 = arith.andi %3, %4 : i1
    %6 = arith.extui %5 : i1 to i32
    %c0_i32_3 = arith.constant 0 : i32
    %7 = arith.cmpi ne, %6, %c0_i32_3 : i32
    scf.if %7 {
      %c0_24 = arith.constant 0 : index
      %c0_25 = arith.constant 0 : index
      %32 = vector.load %arg6[%c0_24, %c0_25] : memref<8x128xf32, #tpu.memory_space<vmem>>, vector<8x128xf32>
      %c0_26 = arith.constant 0 : index
      %c0_27 = arith.constant 0 : index
      %33 = vector.load %arg7[%c0_26, %c0_27] : memref<8x128xf32, #tpu.memory_space<vmem>>, vector<8x128xf32>
      %34 = arith.subf %32, %33 : vector<8x128xf32>
      %c0_28 = arith.constant 0 : index
      %c0_29 = arith.constant 0 : index
      %35 = vector.load %arg8[%c0_28, %c0_29] : memref<8x128xf32, #tpu.memory_space<vmem>>, vector<8x128xf32>
      %c0_30 = arith.constant 0 : index
      %c0_31 = arith.constant 0 : index
      %36 = vector.load %arg9[%c0_30, %c0_31] : memref<8x128xf32, #tpu.memory_space<vmem>>, vector<8x128xf32>
      %37 = arith.subf %35, %36 : vector<8x128xf32>
      %c0_32 = arith.constant 0 : index
      %c0_33 = arith.constant 0 : index
      %c0_34 = arith.constant 0 : index
      %38 = vector.load %arg10[%c0_32, %c0_33, %c0_34] : memref<1x8x128xf32, #tpu.memory_space<vmem>>, vector<1x8x128xf32>
      %39 = vector.shape_cast %38 : vector<1x8x128xf32> to vector<8x128xf32>
      %40 = arith.mulf %34, %34 : vector<8x128xf32>
      %41 = arith.addf %39, %40 : vector<8x128xf32>
      %c0_35 = arith.constant 0 : index
      %c0_36 = arith.constant 0 : index
      %c0_37 = arith.constant 0 : index
      %42 = vector.load %arg10[%c0_35, %c0_36, %c0_37] : memref<1x8x128xf32, #tpu.memory_space<vmem>>, vector<1x8x128xf32>
      %43 = vector.shape_cast %42 : vector<1x8x128xf32> to vector<8x128xf32>
      %44 = vector.shape_cast %41 : vector<8x128xf32> to vector<1x8x128xf32>
      tpu.vector_store %arg10[%c0_35, %c0_36, %c0_37], %44 {strides = array<i32>} : memref<1x8x128xf32, #tpu.memory_space<vmem>>, vector<1x8x128xf32>,
      %c0_38 = arith.constant 0 : index
      %c0_39 = arith.constant 0 : index
      %c0_40 = arith.constant 0 : index
      %45 = vector.load %arg11[%c0_38, %c0_39, %c0_40] : memref<1x8x128xf32, #tpu.memory_space<vmem>>, vector<1x8x128xf32>
      %46 = vector.shape_cast %45 : vector<1x8x128xf32> to vector<8x128xf32>
      %47 = arith.mulf %37, %37 : vector<8x128xf32>
      %48 = arith.addf %46, %47 : vector<8x128xf32>
      %c0_41 = arith.constant 0 : index
      %c0_42 = arith.constant 0 : index
      %c0_43 = arith.constant 0 : index
      %49 = vector.load %arg11[%c0_41, %c0_42, %c0_43] : memref<1x8x128xf32, #tpu.memory_space<vmem>>, vector<1x8x128xf32>
      %50 = vector.shape_cast %49 : vector<1x8x128xf32> to vector<8x128xf32>
      %51 = vector.shape_cast %48 : vector<8x128xf32> to vector<1x8x128xf32>
      tpu.vector_store %arg11[%c0_41, %c0_42, %c0_43], %51 {strides = array<i32>} : memref<1x8x128xf32, #tpu.memory_space<vmem>>, vector<1x8x128xf32>,
    } else {
    }
    %c0 = arith.constant 0 : index
    %c0_4 = arith.constant 0 : index
    %8 = vector.load %arg2[%c0, %c0_4] : memref<8x128xf32, #tpu.memory_space<vmem>>, vector<8x128xf32>
    %c0_5 = arith.constant 0 : index
    %c0_6 = arith.constant 0 : index
    %9 = vector.load %arg3[%c0_5, %c0_6] : memref<8x128xf32, #tpu.memory_space<vmem>>, vector<8x128xf32>
    %10 = arith.subf %8, %9 : vector<8x128xf32>
    %11 = arith.mulf %10, %10 : vector<8x128xf32>
    %c0_7 = arith.constant 0 : index
    %c0_8 = arith.constant 0 : index
    %c0_9 = arith.constant 0 : index
    %12 = vector.load %arg10[%c0_7, %c0_8, %c0_9] : memref<1x8x128xf32, #tpu.memory_space<vmem>>, vector<1x8x128xf32>
    %13 = vector.shape_cast %12 : vector<1x8x128xf32> to vector<8x128xf32>
    %14 = vector.shape_cast %11 : vector<8x128xf32> to vector<1x8x128xf32>
    %cst = arith.constant dense<0.000000e+00> : vector<8x128xf32>
    %15 = vector.multi_reduction <add>, %14, %cst [0] : vector<1x8x128xf32> to vector<8x128xf32>
    %16 = arith.addf %13, %15 : vector<8x128xf32>
    %c0_10 = arith.constant 0 : index
    %c0_11 = arith.constant 0 : index
    %c0_12 = arith.constant 0 : index
    %17 = vector.load %arg10[%c0_10, %c0_11, %c0_12] : memref<1x8x128xf32, #tpu.memory_space<vmem>>, vector<1x8x128xf32>
    %18 = vector.shape_cast %17 : vector<1x8x128xf32> to vector<8x128xf32>
    %19 = vector.shape_cast %16 : vector<8x128xf32> to vector<1x8x128xf32>
    tpu.vector_store %arg10[%c0_10, %c0_11, %c0_12], %19 {strides = array<i32>} : memref<1x8x128xf32, #tpu.memory_space<vmem>>, vector<1x8x128xf32>,
    %c0_13 = arith.constant 0 : index
    %c0_14 = arith.constant 0 : index
    %20 = vector.load %arg4[%c0_13, %c0_14] : memref<16x128xf32, #tpu.memory_space<vmem>>, vector<16x128xf32>
    %c0_15 = arith.constant 0 : index
    %c0_16 = arith.constant 0 : index
    %21 = vector.load %arg5[%c0_15, %c0_16] : memref<16x128xf32, #tpu.memory_space<vmem>>, vector<16x128xf32>
    %22 = arith.subf %20, %21 : vector<16x128xf32>
    %23 = arith.mulf %22, %22 : vector<16x128xf32>
    %c0_17 = arith.constant 0 : index
    %c0_18 = arith.constant 0 : index
    %c0_19 = arith.constant 0 : index
    %24 = vector.load %arg11[%c0_17, %c0_18, %c0_19] : memref<1x8x128xf32, #tpu.memory_space<vmem>>, vector<1x8x128xf32>
    %25 = vector.shape_cast %24 : vector<1x8x128xf32> to vector<8x128xf32>
    %26 = vector.shape_cast %23 : vector<16x128xf32> to vector<2x8x128xf32>
    %cst_20 = arith.constant dense<0.000000e+00> : vector<8x128xf32>
    %27 = vector.multi_reduction <add>, %26, %cst_20 [0] : vector<2x8x128xf32> to vector<8x128xf32>
    %28 = arith.addf %25, %27 : vector<8x128xf32>
    %c0_21 = arith.constant 0 : index
    %c0_22 = arith.constant 0 : index
    %c0_23 = arith.constant 0 : index
    %29 = vector.load %arg11[%c0_21, %c0_22, %c0_23] : memref<1x8x128xf32, #tpu.memory_space<vmem>>, vector<1x8x128xf32>
    %30 = vector.shape_cast %29 : vector<1x8x128xf32> to vector<8x128xf32>
    %31 = vector.shape_cast %28 : vector<8x128xf32> to vector<1x8x128xf32>
    tpu.vector_store %arg11[%c0_21, %c0_22, %c0_23], %31 {strides = array<i32>} : memref<1x8x128xf32, #tpu.memory_space<vmem>>, vector<1x8x128xf32>,
    return
  }
  func.func @transform_0(%arg0: i32, %arg1: i32) -> (i32, i32) {
    %c1_i32 = arith.constant 1 : i32
    %0 = arith.muli %arg0, %c1_i32 : i32
    %1 = arith.addi %0, %arg1 : i32
    %c0_i32 = arith.constant 0 : i32
    %c0_i32_0 = arith.constant 0 : i32
    return %1, %c0_i32 : i32, i32
  }
  func.func @transform_1(%arg0: i32, %arg1: i32) -> (i32, i32) {
    %c1_i32 = arith.constant 1 : i32
    %0 = arith.muli %arg0, %c1_i32 : i32
    %1 = arith.addi %0, %arg1 : i32
    %c0_i32 = arith.constant 0 : i32
    %c0_i32_0 = arith.constant 0 : i32
    return %1, %c0_i32 : i32, i32
  }
  func.func @transform_2(%arg0: i32, %arg1: i32) -> (i32, i32) {
    %c1_i32 = arith.constant 1 : i32
    %0 = arith.muli %arg0, %c1_i32 : i32
    %1 = arith.addi %0, %arg1 : i32
    %c0_i32 = arith.constant 0 : i32
    %c0_i32_0 = arith.constant 0 : i32
    return %1, %c0_i32 : i32, i32
  }
  func.func @transform_3(%arg0: i32, %arg1: i32) -> (i32, i32) {
    %c1_i32 = arith.constant 1 : i32
    %0 = arith.muli %arg0, %c1_i32 : i32
    %1 = arith.addi %0, %arg1 : i32
    %c0_i32 = arith.constant 0 : i32
    %c0_i32_0 = arith.constant 0 : i32
    return %1, %c0_i32 : i32, i32
  }
  func.func @transform_4(%arg0: i32, %arg1: i32) -> (i32, i32) {
    %c0_i32 = arith.constant 0 : i32
    %c0_i32_0 = arith.constant 0 : i32
    %c0_i32_1 = arith.constant 0 : i32
    return %c0_i32, %c0_i32_0 : i32, i32
  }
  func.func @transform_5(%arg0: i32, %arg1: i32) -> (i32, i32) {
    %c0_i32 = arith.constant 0 : i32
    %c0_i32_0 = arith.constant 0 : i32
    %c0_i32_1 = arith.constant 0 : i32
    return %c0_i32, %c0_i32_0 : i32, i32
  }
  func.func @transform_6(%arg0: i32, %arg1: i32) -> (i32, i32) {
    %c0_i32 = arith.constant 0 : i32
    %c0_i32_0 = arith.constant 0 : i32
    %c0_i32_1 = arith.constant 0 : i32
    return %c0_i32, %c0_i32_0 : i32, i32
  }
  func.func @transform_7(%arg0: i32, %arg1: i32) -> (i32, i32) {
    %c0_i32 = arith.constant 0 : i32
    %c0_i32_0 = arith.constant 0 : i32
    %c0_i32_1 = arith.constant 0 : i32
    return %c0_i32, %c0_i32_0 : i32, i32
  }
  func.func @transform_8(%arg0: i32, %arg1: i32) -> (i32, i32, i32) {
    %c0_i32 = arith.constant 0 : i32
    %c0_i32_0 = arith.constant 0 : i32
    %c0_i32_1 = arith.constant 0 : i32
    return %arg0, %c0_i32, %c0_i32_0 : i32, i32, i32
  }
  func.func @transform_9(%arg0: i32, %arg1: i32) -> (i32, i32, i32) {
    %c0_i32 = arith.constant 0 : i32
    %c0_i32_0 = arith.constant 0 : i32
    %c0_i32_1 = arith.constant 0 : i32
    return %arg0, %c0_i32, %c0_i32_0 : i32, i32, i32
  }
}

</mosaic_0001>

<llo_original>
// kernel: custom_loss_ez_hx_hy.1
$region0: #{custom_loss_ez_hx_hy.1}
  #allocation0 [shape = 'u32[]', space=smem, size = 0x4, offset = 0x4, fixed_abs, tag = 'smem constant byte address 0x4 - core index']
  #allocation1 [shape = 'u32[144,128]{1,0:T(1,128)}', space=vmem, size = 0x12000, scoped, tag = 'internal scratch']
  %s0 = inlined_call_operand.vmem [shape: f32[8,128], index: 0, kind: input, shape index: {}]
  %s1 = inlined_call_operand.vmem [shape: f32[8,128], index: 1, kind: input, shape index: {}]
  %s2 = inlined_call_operand.vmem [shape: f32[16,128], index: 2, kind: input, shape index: {}]
  %s3 = inlined_call_operand.vmem [shape: f32[16,128], index: 3, kind: input, shape index: {}]
  %s4 = inlined_call_operand.vmem [shape: f32[8,128], index: 4, kind: input, shape index: {}]
  %s5 = inlined_call_operand.vmem [shape: f32[8,128], index: 5, kind: input, shape index: {}]
  %s6 = inlined_call_operand.vmem [shape: f32[8,128], index: 6, kind: input, shape index: {}, may-alias: {6,7}]
  %s7 = inlined_call_operand.vmem [shape: f32[8,128], index: 7, kind: input, shape index: {}, may-alias: {6,7}]
  %s8 = inlined_call_operand.vmem [shape: f32[1,8,128], index: 8, kind: output, shape index: {0}]
  %s9 = inlined_call_operand.vmem [shape: f32[1,8,128], index: 9, kind: output, shape index: {1}]
  %10 = xla_tuple %s8, %s9
  %s11 = sld [smem:[#allocation0]]
  $region58: #{custom_loss_ez_hx_hy.1} parent=0
    _
  %s13 = ssub.s32 1, %s11
  %s14 = scalar_select 0, %s13, %s11
  // Predicated region
  $region2: #{custom_loss_ez_hx_hy.1} parent=0 // pred_check
    _
  $region3: #{custom_loss_ez_hx_hy.1} parent=0 // pred_check_branch
    %16 = sbr.rel (0) target = $region5
  $region4: #{custom_loss_ez_hx_hy.1} parent=0 // pred_region
    %s17 = sadd.s32 0, 0
    %p18 = scmp.lt.s32.totalorder %s17, 0
    %s19 = scalar_select %p18, %s17, 0
    %s20 = smul.addr %s19, 8
    %s21 = scalar_lea.vmem %s0, %s20
    %s22 = sadd.s32 0, 0
  $region5: #{custom_loss_ez_hx_hy.1} parent=0 // pred_fallthru
    _
  // Predicated region
  $region6: #{custom_loss_ez_hx_hy.1} parent=0 // pred_check
    _
  $region7: #{custom_loss_ez_hx_hy.1} parent=0 // pred_check_branch
    %24 = sbr.rel (0) target = $region9
  $region8: #{custom_loss_ez_hx_hy.1} parent=0 // pred_region
    %s25 = sadd.s32 0, 0
    %p26 = scmp.lt.s32.totalorder %s25, 0
    %s27 = scalar_select %p26, %s25, 0
    %s28 = smul.addr %s27, 8
    %s29 = scalar_lea.vmem %s1, %s28
    %s30 = sadd.s32 0, 0
  $region9: #{custom_loss_ez_hx_hy.1} parent=0 // pred_fallthru
    _
  // Predicated region
  $region10: #{custom_loss_ez_hx_hy.1} parent=0 // pred_check
    _
  $region11: #{custom_loss_ez_hx_hy.1} parent=0 // pred_check_branch
    %32 = sbr.rel (0) target = $region13
  $region12: #{custom_loss_ez_hx_hy.1} parent=0 // pred_region
    %s33 = sadd.s32 0, 0
    %s34 = smul.u32 2, %s33
    %p35 = scmp.lt.s32.totalorder %s34, 1
    %s36 = scalar_select %p35, %s34, 1
    %s37 = smul.addr %s36, 8
    %s38 = scalar_lea.vmem %s2, %s37
    %s39 = sadd.s32 0, 0
    %s40 = smul.u32 2, %s39
  $region13: #{custom_loss_ez_hx_hy.1} parent=0 // pred_fallthru
    _
  // Predicated region
  $region14: #{custom_loss_ez_hx_hy.1} parent=0 // pred_check
    _
  $region15: #{custom_loss_ez_hx_hy.1} parent=0 // pred_check_branch
    %42 = sbr.rel (0) target = $region17
  $region16: #{custom_loss_ez_hx_hy.1} parent=0 // pred_region
    %s43 = sadd.s32 0, 0
    %s44 = smul.u32 2, %s43
    %p45 = scmp.lt.s32.totalorder %s44, 1
    %s46 = scalar_select %p45, %s44, 1
    %s47 = smul.addr %s46, 8
    %s48 = scalar_lea.vmem %s3, %s47
    %s49 = sadd.s32 0, 0
    %s50 = smul.u32 2, %s49
  $region17: #{custom_loss_ez_hx_hy.1} parent=0 // pred_fallthru
    _
  // Predicated region
  $region18: #{custom_loss_ez_hx_hy.1} parent=0 // pred_check
    _
  $region19: #{custom_loss_ez_hx_hy.1} parent=0 // pred_check_branch
    %52 = sbr.rel (0) target = $region21
  $region20: #{custom_loss_ez_hx_hy.1} parent=0 // pred_region
    _
  $region21: #{custom_loss_ez_hx_hy.1} parent=0 // pred_fallthru
    _
  // Predicated region
  $region22: #{custom_loss_ez_hx_hy.1} parent=0 // pred_check
    _
  $region23: #{custom_loss_ez_hx_hy.1} parent=0 // pred_check_branch
    %54 = sbr.rel (0) target = $region25
  $region24: #{custom_loss_ez_hx_hy.1} parent=0 // pred_region
    _
  $region25: #{custom_loss_ez_hx_hy.1} parent=0 // pred_fallthru
    _
  // Predicated region
  $region26: #{custom_loss_ez_hx_hy.1} parent=0 // pred_check
    _
  $region27: #{custom_loss_ez_hx_hy.1} parent=0 // pred_check_branch
    %56 = sbr.rel (0) target = $region29
  $region28: #{custom_loss_ez_hx_hy.1} parent=0 // pred_region
    _
  $region29: #{custom_loss_ez_hx_hy.1} parent=0 // pred_fallthru
    _
  // Predicated region
  $region30: #{custom_loss_ez_hx_hy.1} parent=0 // pred_check
    _
  $region31: #{custom_loss_ez_hx_hy.1} parent=0 // pred_check_branch
    %58 = sbr.rel (0) target = $region33
  $region32: #{custom_loss_ez_hx_hy.1} parent=0 // pred_region
    _
  $region33: #{custom_loss_ez_hx_hy.1} parent=0 // pred_fallthru
    _
  %s59 = sadd.s32 0, 0
  %p60 = scmp.lt.s32.totalorder %s59, 0
  %s61 = scalar_select %p60, %s59, 0
  %s62 = smul.addr %s61, 8
  %s63 = scalar_lea.vmem %s0, %s62
  %s64 = sadd.s32 0, 0
  %p65 = scmp.lt.s32.totalorder %s64, 0
  %s66 = scalar_select %p65, %s64, 0
  %s67 = smul.addr %s66, 8
  %s68 = scalar_lea.vmem %s1, %s67
  %s69 = sadd.s32 0, 0
  %s70 = smul.u32 2, %s69
  %p71 = scmp.lt.s32.totalorder %s70, 1
  %s72 = scalar_select %p71, %s70, 1
  %s73 = smul.addr %s72, 8
  %s74 = scalar_lea.vmem %s2, %s73
  %s75 = sadd.s32 0, 0
  %s76 = smul.u32 2, %s75
  %p77 = scmp.lt.s32.totalorder %s76, 1
  %s78 = scalar_select %p77, %s76, 1
  %s79 = smul.addr %s78, 8
  %s80 = scalar_lea.vmem %s3, %s79
  %s81 = sadd.s32 0, 0
  %p82 = scmp.lt.s32.totalorder %s81, 0
  %s83 = scalar_select %p82, %s81, 0
  %s84 = smul.addr %s83, 8
  %s85 = scalar_lea.vmem %s0, %s84
  %s86 = sadd.s32 0, 0
  %s87 = sadd.s32 0, 0
  %p88 = scmp.lt.s32.totalorder %s87, 0
  %s89 = scalar_select %p88, %s87, 0
  %s90 = smul.addr %s89, 8
  %s91 = scalar_lea.vmem %s1, %s90
  %s92 = sadd.s32 0, 0
  %s93 = sadd.s32 0, 0
  %s94 = smul.u32 2, %s93
  %p95 = scmp.lt.s32.totalorder %s94, 1
  %s96 = scalar_select %p95, %s94, 1
  %s97 = smul.addr %s96, 8
  %s98 = scalar_lea.vmem %s2, %s97
  %s99 = sadd.s32 0, 0
  %s100 = smul.u32 2, %s99
  %s101 = sadd.s32 0, 0
  %s102 = smul.u32 2, %s101
  %p103 = scmp.lt.s32.totalorder %s102, 1
  %s104 = scalar_select %p103, %s102, 1
  %s105 = smul.addr %s104, 8
  %s106 = scalar_lea.vmem %s3, %s105
  %s107 = sadd.s32 0, 0
  %s108 = smul.u32 2, %s107
  %p109 = scmp.eq.s32.totalorder 0, 0
  // Predicated region
  $region34: #{custom_loss_ez_hx_hy.1} parent=0 // pred_check
    %p110 = pneg %p109
  $region35: #{custom_loss_ez_hx_hy.1} parent=0 // pred_check_branch
    %112 = sbr.rel (%p110) target = $region37
  $region36: #{custom_loss_ez_hx_hy.1} parent=0 // pred_region
    %113 = vst [vmem:[%s8] sm:$0xff] 0.0
    %114 = vst [vmem:[%s9] sm:$0xff] 0.0
  $region37: #{custom_loss_ez_hx_hy.1} parent=0 // pred_fallthru
    _
  %p115 = scmp.eq.s32.totalorder 0, 0
  %p116 = pnand %p115, %p109
  %p117 = pneg %p116
  // Predicated region
  $region38: #{custom_loss_ez_hx_hy.1} parent=0 // pred_check
    _
  $region39: #{custom_loss_ez_hx_hy.1} parent=0 // pred_check_branch
    %119 = sbr.rel (%p116) target = $region41
  $region40: #{custom_loss_ez_hx_hy.1} parent=0 // pred_region
    %v120 = vld [vmem:[%s4] sm:$0xff]
    %v121 = vld [vmem:[%s5] sm:$0xff]
    %v122 = vsub.f32 %v120, %v121
    %v123 = vld [vmem:[%s6] sm:$0xff]
    %v124 = vld [vmem:[%s7] sm:$0xff]
    %v125 = vsub.f32 %v123, %v124
    %v126 = vld [vmem:[%s8] sm:$0xff]
    %v127 = vmul.f32 %v122, %v122
    %v128 = vadd.f32 %v126, %v127
    %129 = vst [vmem:[%s8] sm:$0xff] %v128
    %v130 = vld [vmem:[%s9] sm:$0xff]
    %v131 = vmul.f32 %v125, %v125
    %v132 = vadd.f32 %v130, %v131
    %133 = vst [vmem:[%s9] sm:$0xff] %v132
  $region41: #{custom_loss_ez_hx_hy.1} parent=0 // pred_fallthru
    _
  %v134 = vld [vmem:[%s85] sm:$0xff]
  %v135 = vld [vmem:[%s91] sm:$0xff]
  %v136 = vsub.f32 %v134, %v135
  %v137 = vmul.f32 %v136, %v136
  %v138 = vld [vmem:[%s8] sm:$0xff]
  %v139 = vadd.f32 %v137, 0.0
  %v140 = vadd.f32 %v138, %v139
  %141 = vst [vmem:[%s8] sm:$0xff] %v140
  %v142 = vld [vmem:[%s98] sm:$0xff]
  %v143 = vld [vmem:[%s98 + $0x8] sm:$0xff]
  %v144 = vld [vmem:[%s106] sm:$0xff]
  %v145 = vld [vmem:[%s106 + $0x8] sm:$0xff]
  %v146 = vsub.f32 %v142, %v144
  %v147 = vsub.f32 %v143, %v145
  %v148 = vmul.f32 %v146, %v146
  %v149 = vmul.f32 %v147, %v147
  %v150 = vld [vmem:[%s9] sm:$0xff]
  %v151 = vadd.f32 %v148, %v149
  %v152 = vadd.f32 %v150, %v151
  %153 = vst [vmem:[%s9] sm:$0xff] %v152
  // Predicated region
  $region42: #{custom_loss_ez_hx_hy.1} parent=0 // pred_check
    _
  $region43: #{custom_loss_ez_hx_hy.1} parent=0 // pred_check_branch
    %155 = sbr.rel (0) target = $region45
  $region44: #{custom_loss_ez_hx_hy.1} parent=0 // pred_region
    _
  $region45: #{custom_loss_ez_hx_hy.1} parent=0 // pred_fallthru
    _
  // Predicated region
  $region46: #{custom_loss_ez_hx_hy.1} parent=0 // pred_check
    _
  $region47: #{custom_loss_ez_hx_hy.1} parent=0 // pred_check_branch
    %157 = sbr.rel (0) target = $region49
  $region48: #{custom_loss_ez_hx_hy.1} parent=0 // pred_region
    _
  $region49: #{custom_loss_ez_hx_hy.1} parent=0 // pred_fallthru
    _
  // Predicated region
  $region50: #{custom_loss_ez_hx_hy.1} parent=0 // pred_check
    _
  $region51: #{custom_loss_ez_hx_hy.1} parent=0 // pred_check_branch
    %159 = sbr.rel (0) target = $region53
  $region52: #{custom_loss_ez_hx_hy.1} parent=0 // pred_region
    _
  $region53: #{custom_loss_ez_hx_hy.1} parent=0 // pred_fallthru
    _
  // Predicated region
  $region54: #{custom_loss_ez_hx_hy.1} parent=0 // pred_check
    _
  $region55: #{custom_loss_ez_hx_hy.1} parent=0 // pred_check_branch
    %161 = sbr.rel (0) target = $region57
  $region56: #{custom_loss_ez_hx_hy.1} parent=0 // pred_region
    _
  $region57: #{custom_loss_ez_hx_hy.1} parent=0 // pred_fallthru
    _

</llo_original>
